<compile_context>
chip_gen: v5e
topology: v5e:2x2
jax: 0.10.0
libtpu: 0.0.40
codegen_flags: <defaults>
</compile_context>

<pallas_src>
import functools

import jax
import jax.numpy as jnp
from jax.experimental import pallas as pl
from jax.experimental.pallas import tpu as pltpu

N_NODES = 25  # hard-coded in JansonShannon.discriminate


def _softplus(x):
    # softplus(x) = log(1 + exp(x)); stable form.
    #   -log(sigmoid(s) + EPS)     ~= softplus(-s)
    #   -log(1 - sigmoid(s) + EPS) ~= softplus(s)
    return jnp.maximum(x, 0.0) + jnp.log(1.0 + jnp.exp(-jnp.abs(x)))


def _combined_loss_kernel(logits_ref, label_ref, g_ref, l_ref, neg_ref, k1_ref,
                          loss_ref, acc_ref, *, bt_total, block_bt):
    step = pl.program_id(0)
    nsteps = pl.num_programs(0)

    # ----- step 0: cross-entropy (reduction='mean') over the whole (N, C) head -----
    @pl.when(step == 0)
    def _():
        logits = logits_ref[...].astype(jnp.float32)          # (N, C)
        labels = label_ref[...]                                # (N, 1) int32
        n, c = logits.shape
        class_ids = jax.lax.broadcasted_iota(jnp.int32, (n, c), 1)
        onehot = (class_ids == labels).astype(jnp.float32)
        m = jnp.max(logits, axis=1, keepdims=True)
        lse = m + jnp.log(jnp.sum(jnp.exp(logits - m), axis=1, keepdims=True))
        picked = jnp.sum(onehot * logits, axis=1, keepdims=True)
        ce = jnp.sum(lse - picked) / jnp.float32(n)
        acc_ref[...] = jnp.reshape(ce, (1, 1))

    # ----- every step: Jensen-Shannon partial for this block of B*T rows -----
    g = g_ref[...].astype(jnp.float32)      # (block_bt, D)
    pos = l_ref[...].astype(jnp.float32)    # (block_bt, 25, D)
    neg = neg_ref[...].astype(jnp.float32)  # (block_bt, 25, D)

    gb = jnp.broadcast_to(g[:, None, :], pos.shape)      # hoisted, reused twice
    pos_score = jnp.sum(pos * gb, axis=-1)               # (block_bt, 25)
    neg_score = jnp.sum(neg * gb, axis=-1)               # (block_bt, 25)

    pos_loss = jnp.mean(_softplus(-pos_score), axis=1, keepdims=True)  # (block_bt, 1)
    neg_loss = jnp.mean(_softplus(neg_score), axis=1, keepdims=True)   # (block_bt, 1)

    # Mask rows of the (possibly partial) last block.
    rows = step * block_bt + jax.lax.broadcasted_iota(jnp.int32, (block_bt, 1), 0)
    valid = rows < bt_total
    contrib = jnp.where(valid, pos_loss + neg_loss, 0.0)
    js_partial = -jnp.sum(contrib)

    acc_ref[...] += jnp.reshape(k1_ref[0] * js_partial, (1, 1))

    @pl.when(step == nsteps - 1)
    def _():
        loss_ref[...] = acc_ref[...]


def _choose_block_bt(bt, n_nodes, embed_dim, itemsize, budget_bytes=16 * 1024 * 1024):
    """Largest row-block whose double-buffered l/neg/g tiles fit the VMEM budget."""
    padded_nodes = -(-n_nodes // 8) * 8                 # node axis pads to sublanes
    per_row = 2 * 2 * padded_nodes * embed_dim * itemsize + 2 * embed_dim * itemsize
    blk = budget_bytes // max(per_row, 1)
    blk = (blk // 8) * 8
    if blk <= 0:
        blk = 8
    if blk >= bt:
        return bt                                       # single / whole-dim block
    return blk


def combined_loss(out, label, g_enc, l_enc, neg_enc, s_l=None, adj=None, *,
                  k1=1.0, block_bt=None):
    """JAX/Pallas equivalent of Combined_loss.forward (s_l, adj are unused)."""
    batch_s, time_dim, n_nodes, embed_dim = l_enc.shape
    assert n_nodes == N_NODES, "JansonShannon.discriminate hard-codes n_nodes=25"

    bt = batch_s * time_dim
    # Native-dtype DMA: reshape only, upcast happens inside the kernel.
    g = g_enc.reshape(bt, embed_dim)
    lz = l_enc.reshape(bt, n_nodes, embed_dim)
    nz = neg_enc.reshape(bt, n_nodes, embed_dim)
    logits = out
    label2d = label.astype(jnp.int32).reshape(-1, 1)
    k1_arr = jnp.asarray([k1], dtype=jnp.float32)       # runtime scalar -> no recompile

    if block_bt is None:
        block_bt = _choose_block_bt(bt, n_nodes, embed_dim,
                                    jnp.dtype(lz.dtype).itemsize)
    block_bt = min(block_bt, bt)
    if block_bt != bt and block_bt % 8 != 0:
        block_bt = max(8, (block_bt // 8) * 8)
    grid = (pl.cdiv(bt, block_bt),)

    n_rows, n_classes = logits.shape
    isz = lambda a: jnp.dtype(a.dtype).itemsize
    bytes_accessed = (logits.size * isz(logits) + label2d.size * 4 +
                      g.size * isz(g) + lz.size * isz(lz) + nz.size * isz(nz) + 4)
    flops = 2 * bt * n_nodes * embed_dim * 2 + 2 * bt * n_nodes * 4 + 5 * n_rows * n_classes
    transcendentals = 2 * bt * n_nodes * 2 + n_rows * n_classes + n_rows
    cost = pl.CostEstimate(flops=flops, transcendentals=transcendentals,
                           bytes_accessed=bytes_accessed)

    kernel = functools.partial(_combined_loss_kernel, bt_total=bt, block_bt=block_bt)

    grid_spec = pltpu.PrefetchScalarGridSpec(
        num_scalar_prefetch=0,
        grid=grid,
        in_specs=[
            pl.BlockSpec((n_rows, n_classes), lambda i: (0, 0)),          # logits (whole)
            pl.BlockSpec((n_rows, 1), lambda i: (0, 0)),                  # labels (whole)
            pl.BlockSpec((block_bt, embed_dim), lambda i: (i, 0)),        # g block
            pl.BlockSpec((block_bt, n_nodes, embed_dim), lambda i: (i, 0, 0)),  # l block
            pl.BlockSpec((block_bt, n_nodes, embed_dim), lambda i: (i, 0, 0)),  # neg block
            pl.BlockSpec(memory_space=pltpu.MemorySpace.SMEM),            # k1 scalar
        ],
        out_specs=pl.BlockSpec((1, 1), lambda i: (0, 0)),
        scratch_shapes=[pltpu.VMEM((1, 1), jnp.float32)],
    )

    result = pl.pallas_call(
        kernel,
        out_shape=jax.ShapeDtypeStruct((1, 1), jnp.float32),
        grid_spec=grid_spec,
        compiler_params=pltpu.CompilerParams(
            dimension_semantics=("arbitrary",),           # accumulator carried across steps
            vmem_limit_bytes=48 * 1024 * 1024,            # fits v7x 64 MiB with headroom
        ),
        cost_estimate=cost,
    )(logits, label2d, g, lz, nz, k1_arr)
    return result[0, 0]


def _reference(out, label, g_enc, l_enc, neg_enc, k1=1.0):
    """Pure-JAX reference mirroring the PyTorch module (for sanity check)."""
    EPS = 1e-15
    b, t, n_nodes, d = l_enc.shape
    g = g_enc.reshape(-1, d).astype(jnp.float32)
    lz = l_enc.reshape(-1, n_nodes, d).astype(jnp.float32)
    nz = neg_enc.reshape(-1, n_nodes, d).astype(jnp.float32)
    logits = out.astype(jnp.float32)

    def score(z):
        return jnp.einsum("bnd,bd->bn", z, g)

    pos_loss = jnp.mean(-jnp.log(jax.nn.sigmoid(score(lz)) + EPS), axis=1)
    neg_loss = jnp.mean(-jnp.log(1.0 - jax.nn.sigmoid(score(nz)) + EPS), axis=1)
    js = -jnp.sum(pos_loss + neg_loss)

    logp = jax.nn.log_softmax(logits, axis=-1)
    ce = -jnp.mean(jnp.take_along_axis(logp, label[:, None].astype(jnp.int32), axis=1))
    return ce + k1 * js


if __name__ == "__main__":
    key = jax.random.PRNGKey(0)
    k_out, k_lab, k_g, k_l, k_n = jax.random.split(key, 5)

    # ---- test 1: small float32 inputs, single block ----
    batch, time_dim, embed_dim, num_classes = 2, 2, 32, 6
    bt = batch * time_dim
    out = jax.random.normal(k_out, (bt, num_classes), dtype=jnp.float32)
    label = jax.random.randint(k_lab, (bt,), 0, num_classes, dtype=jnp.int32)
    g_enc = 0.25 * jax.random.normal(k_g, (batch, time_dim, embed_dim), dtype=jnp.float32)
    l_enc = 0.25 * jax.random.normal(k_l, (batch, time_dim, N_NODES, embed_dim), dtype=jnp.float32)
    neg_enc = 0.25 * jax.random.normal(k_n, (batch, time_dim, N_NODES, embed_dim), dtype=jnp.float32)

    loss = jax.block_until_ready(
        combined_loss(out, label, g_enc, l_enc, neg_enc, None, None, k1=1.0))
    ref = jax.block_until_ready(_reference(out, label, g_enc, l_enc, neg_enc, k1=1.0))
    assert jnp.allclose(loss, ref, rtol=1e-5, atol=1e-5), (loss, ref)

    # ---- test 2: gridded path with a partial (masked) last block and k1 != 1 ----
    batch2, time2 = 3, 7
    bt2 = batch2 * time2
    ks = jax.random.split(jax.random.PRNGKey(1), 5)
    out2 = jax.random.normal(ks[0], (bt2, num_classes), dtype=jnp.float32)
    label2 = jax.random.randint(ks[1], (bt2,), 0, num_classes, dtype=jnp.int32)
    g2 = 0.25 * jax.random.normal(ks[2], (batch2, time2, embed_dim), dtype=jnp.float32)
    l2 = 0.25 * jax.random.normal(ks[3], (batch2, time2, N_NODES, embed_dim), dtype=jnp.float32)
    n2 = 0.25 * jax.random.normal(ks[4], (batch2, time2, N_NODES, embed_dim), dtype=jnp.float32)

    loss2 = jax.block_until_ready(
        combined_loss(out2, label2, g2, l2, n2, None, None, k1=0.5, block_bt=8))
    ref2 = jax.block_until_ready(_reference(out2, label2, g2, l2, n2, k1=0.5))
    assert jnp.allclose(loss2, ref2, rtol=1e-5, atol=1e-5), (loss2, ref2)

    # ---- test 3: bf16 inputs (native-dtype DMA, in-kernel upcast) ----
    out_bf = out.astype(jnp.bfloat16)
    g_bf = g_enc.astype(jnp.bfloat16)
    l_bf = l_enc.astype(jnp.bfloat16)
    n_bf = neg_enc.astype(jnp.bfloat16)
    loss3 = jax.block_until_ready(
        combined_loss(out_bf, label, g_bf, l_bf, n_bf, None, None, k1=1.0))
    ref3 = jax.block_until_ready(
        _reference(out_bf.astype(jnp.float32), label, g_bf.astype(jnp.float32),
                   l_bf.astype(jnp.float32), n_bf.astype(jnp.float32), k1=1.0))
    assert jnp.allclose(loss3, ref3, rtol=1e-4, atol=1e-4), (loss3, ref3)

    print("KERNEL_OK")
</pallas_src>

<mosaic_0001>
module attributes {stable_mosaic.version = 11 : i64} {
  func.func @_combined_loss_kernel(%arg0: i32, %arg1: memref<4x6xf32, #tpu.memory_space<vmem>>, %arg2: memref<4x1xi32, #tpu.memory_space<vmem>>, %arg3: memref<4x32xf32, #tpu.memory_space<vmem>>, %arg4: memref<4x25x32xf32, #tpu.memory_space<vmem>>, %arg5: memref<4x25x32xf32, #tpu.memory_space<vmem>>, %arg6: memref<1xf32, #tpu.memory_space<smem>>, %arg7: memref<1x1xf32, #tpu.memory_space<vmem>>, %arg8: memref<1x1xf32, #tpu.memory_space<vmem>>) attributes {dimension_semantics = [#tpu.dimension_semantics<arbitrary>], iteration_bounds = array<i64: 1>, scalar_prefetch = 0 : i64, scratch_operands = 1 : i64, tpu.core_type = #tpu.core_type<tc>, window_params = [{pipeline_mode = #tpu.pipeline_mode<synchronous>, transform_indices = @transform_0, window_bounds = array<i64: 4, 6>}, {pipeline_mode = #tpu.pipeline_mode<synchronous>, transform_indices = @transform_1, window_bounds = array<i64: 4, 1>}, {transform_indices = @transform_2, window_bounds = array<i64: 4, 32>}, {transform_indices = @transform_3, window_bounds = array<i64: 4, 25, 32>}, {transform_indices = @transform_4, window_bounds = array<i64: 4, 25, 32>}, {transform_indices = @transform_5, window_bounds = array<i64: 1>}, {pipeline_mode = #tpu.pipeline_mode<synchronous>, transform_indices = @transform_6, window_bounds = array<i64: 1, 1>}]} {
    %c0_i32 = arith.constant 0 : i32
    %0 = arith.cmpi eq, %arg0, %c0_i32 : i32
    %1 = arith.extui %0 : i1 to i32
    %c0_i32_0 = arith.constant 0 : i32
    %2 = arith.cmpi ne, %1, %c0_i32_0 : i32
    scf.if %2 {
      %c0_31 = arith.constant 0 : index
      %c0_32 = arith.constant 0 : index
      %66 = vector.load %arg1[%c0_31, %c0_32] : memref<4x6xf32, #tpu.memory_space<vmem>>, vector<4x6xf32>
      %c0_33 = arith.constant 0 : index
      %c0_34 = arith.constant 0 : index
      %67 = vector.load %arg2[%c0_33, %c0_34] : memref<4x1xi32, #tpu.memory_space<vmem>>, vector<4x1xi32>
      %68 = tpu.iota {dimensions = array<i32: 1>} : vector<4x6xi32>
      %69 = vector.broadcast %67 : vector<4x1xi32> to vector<4x6xi32>
      %70 = arith.cmpi eq, %68, %69 : vector<4x6xi32>
      %71 = arith.extui %70 : vector<4x6xi1> to vector<4x6xi32>
      %72 = arith.sitofp %71 : vector<4x6xi32> to vector<4x6xf32>
      %cst_35 = arith.constant dense<0xFF800000> : vector<4xf32>
      %73 = vector.multi_reduction <maximumf>, %66, %cst_35 [1] : vector<4x6xf32> to vector<4xf32>
      %74 = vector.shape_cast %73 : vector<4xf32> to vector<4x1xf32>
      %75 = vector.broadcast %74 : vector<4x1xf32> to vector<4x6xf32>
      %76 = arith.subf %66, %75 : vector<4x6xf32>
      %77 = math.exp %76 : vector<4x6xf32>
      %cst_36 = arith.constant dense<0.000000e+00> : vector<4xf32>
      %78 = vector.multi_reduction <add>, %77, %cst_36 [1] : vector<4x6xf32> to vector<4xf32>
      %79 = vector.shape_cast %78 : vector<4xf32> to vector<4x1xf32>
      %80 = math.log %79 : vector<4x1xf32>
      %81 = arith.addf %74, %80 : vector<4x1xf32>
      %82 = arith.mulf %72, %66 : vector<4x6xf32>
      %cst_37 = arith.constant dense<0.000000e+00> : vector<4xf32>
      %83 = vector.multi_reduction <add>, %82, %cst_37 [1] : vector<4x6xf32> to vector<4xf32>
      %84 = vector.shape_cast %83 : vector<4xf32> to vector<4x1xf32>
      %85 = arith.subf %81, %84 : vector<4x1xf32>
      %86 = vector.shape_cast %85 : vector<4x1xf32> to vector<1x4x1xf32>
      %cst_38 = arith.constant dense<0.000000e+00> : vector<1xf32>
      %87 = vector.multi_reduction <add>, %86, %cst_38 [1, 2] : vector<1x4x1xf32> to vector<1xf32>
      %88 = vector.shape_cast %87 : vector<1xf32> to vector<1x1x1xf32>
      %89 = vector.extract %88[0, 0, 0] : f32 from vector<1x1x1xf32>
      %cst_39 = arith.constant 4.000000e+00 : f32
      %90 = arith.divf %89, %cst_39 : f32
      %91 = vector.broadcast %90 : f32 to vector<1x1xf32>
      %c0_40 = arith.constant 0 : index
      %c0_41 = arith.constant 0 : index
      %92 = vector.load %arg8[%c0_40, %c0_41] : memref<1x1xf32, #tpu.memory_space<vmem>>, vector<1x1xf32>
      tpu.vector_store %arg8[%c0_40, %c0_41], %91 {strides = array<i32>} : memref<1x1xf32, #tpu.memory_space<vmem>>, vector<1x1xf32>,
    } else {
    }
    %c0 = arith.constant 0 : index
    %c0_1 = arith.constant 0 : index
    %3 = vector.load %arg3[%c0, %c0_1] : memref<4x32xf32, #tpu.memory_space<vmem>>, vector<4x32xf32>
    %c0_2 = arith.constant 0 : index
    %c0_3 = arith.constant 0 : index
    %c0_4 = arith.constant 0 : index
    %4 = vector.load %arg4[%c0_2, %c0_3, %c0_4] : memref<4x25x32xf32, #tpu.memory_space<vmem>>, vector<4x25x32xf32>
    %c0_5 = arith.constant 0 : index
    %c0_6 = arith.constant 0 : index
    %c0_7 = arith.constant 0 : index
    %5 = vector.load %arg5[%c0_5, %c0_6, %c0_7] : memref<4x25x32xf32, #tpu.memory_space<vmem>>, vector<4x25x32xf32>
    %6 = vector.shape_cast %3 : vector<4x32xf32> to vector<4x1x32xf32>
    %7 = vector.shape_cast %6 : vector<4x1x32xf32> to vector<4x1x32xf32>
    %8 = vector.broadcast %7 : vector<4x1x32xf32> to vector<4x25x32xf32>
    %9 = arith.mulf %4, %8 : vector<4x25x32xf32>
    %cst = arith.constant dense<0.000000e+00> : vector<4x25xf32>
    %10 = vector.multi_reduction <add>, %9, %cst [2] : vector<4x25x32xf32> to vector<4x25xf32>
    %11 = arith.mulf %5, %8 : vector<4x25x32xf32>
    %cst_8 = arith.constant dense<0.000000e+00> : vector<4x25xf32>
    %12 = vector.multi_reduction <add>, %11, %cst_8 [2] : vector<4x25x32xf32> to vector<4x25xf32>
    %cst_9 = arith.constant 0.000000e+00 : f32
    %13 = vector.broadcast %cst_9 : f32 to vector<4x25xf32>
    %14 = arith.subf %13, %10 : vector<4x25xf32>
    %cst_10 = arith.constant 0.000000e+00 : f32
    %15 = vector.broadcast %cst_10 : f32 to vector<4x25xf32>
    %16 = arith.maximumf %14, %15 : vector<4x25xf32>
    %17 = math.absf %14 : vector<4x25xf32>
    %cst_11 = arith.constant 0.000000e+00 : f32
    %18 = vector.broadcast %cst_11 : f32 to vector<4x25xf32>
    %19 = arith.subf %18, %17 : vector<4x25xf32>
    %20 = math.exp %19 : vector<4x25xf32>
    %cst_12 = arith.constant 1.000000e+00 : f32
    %21 = vector.broadcast %cst_12 : f32 to vector<4x25xf32>
    %22 = arith.addf %21, %20 : vector<4x25xf32>
    %23 = math.log %22 : vector<4x25xf32>
    %24 = arith.addf %16, %23 : vector<4x25xf32>
    %cst_13 = arith.constant dense<0.000000e+00> : vector<4xf32>
    %25 = vector.multi_reduction <add>, %24, %cst_13 [1] : vector<4x25xf32> to vector<4xf32>
    %26 = vector.shape_cast %25 : vector<4xf32> to vector<4x1xf32>
    %cst_14 = arith.constant 2.500000e+01 : f32
    %27 = vector.broadcast %cst_14 : f32 to vector<4x1xf32>
    %28 = arith.divf %26, %27 : vector<4x1xf32>
    %cst_15 = arith.constant 0.000000e+00 : f32
    %29 = vector.broadcast %cst_15 : f32 to vector<4x25xf32>
    %30 = arith.maximumf %12, %29 : vector<4x25xf32>
    %31 = math.absf %12 : vector<4x25xf32>
    %cst_16 = arith.constant 0.000000e+00 : f32
    %32 = vector.broadcast %cst_16 : f32 to vector<4x25xf32>
    %33 = arith.subf %32, %31 : vector<4x25xf32>
    %34 = math.exp %33 : vector<4x25xf32>
    %cst_17 = arith.constant 1.000000e+00 : f32
    %35 = vector.broadcast %cst_17 : f32 to vector<4x25xf32>
    %36 = arith.addf %35, %34 : vector<4x25xf32>
    %37 = math.log %36 : vector<4x25xf32>
    %38 = arith.addf %30, %37 : vector<4x25xf32>
    %cst_18 = arith.constant dense<0.000000e+00> : vector<4xf32>
    %39 = vector.multi_reduction <add>, %38, %cst_18 [1] : vector<4x25xf32> to vector<4xf32>
    %40 = vector.shape_cast %39 : vector<4xf32> to vector<4x1xf32>
    %cst_19 = arith.constant 2.500000e+01 : f32
    %41 = vector.broadcast %cst_19 : f32 to vector<4x1xf32>
    %42 = arith.divf %40, %41 : vector<4x1xf32>
    %c4_i32 = arith.constant 4 : i32
    %43 = arith.muli %arg0, %c4_i32 : i32
    %44 = tpu.iota {dimensions = array<i32: 0>} : vector<4x1xi32>
    %45 = vector.broadcast %43 : i32 to vector<4x1xi32>
    %46 = arith.addi %45, %44 : vector<4x1xi32>
    %c4_i32_20 = arith.constant 4 : i32
    %47 = vector.broadcast %c4_i32_20 : i32 to vector<4x1xi32>
    %48 = arith.cmpi slt, %46, %47 : vector<4x1xi32>
    %49 = arith.addf %28, %42 : vector<4x1xf32>
    %cst_21 = arith.constant 0.000000e+00 : f32
    %50 = vector.broadcast %cst_21 : f32 to vector<4x1xf32>
    %51 = arith.select %48, %49, %50 : vector<4x1xi1>, vector<4x1xf32>
    %52 = vector.shape_cast %51 : vector<4x1xf32> to vector<1x4x1xf32>
    %cst_22 = arith.constant dense<0.000000e+00> : vector<1xf32>
    %53 = vector.multi_reduction <add>, %52, %cst_22 [1, 2] : vector<1x4x1xf32> to vector<1xf32>
    %54 = vector.shape_cast %53 : vector<1xf32> to vector<1x1x1xf32>
    %55 = vector.extract %54[0, 0, 0] : f32 from vector<1x1x1xf32>
    %cst_23 = arith.constant 0.000000e+00 : f32
    %56 = arith.subf %cst_23, %55 : f32
    %c0_24 = arith.constant 0 : index
    %c0_25 = arith.constant 0 : index
    %57 = vector.load %arg8[%c0_24, %c0_25] : memref<1x1xf32, #tpu.memory_space<vmem>>, vector<1x1xf32>
    %c0_26 = arith.constant 0 : index
    %58 = memref.load %arg6[%c0_26] : memref<1xf32, #tpu.memory_space<smem>>
    %59 = arith.mulf %58, %56 : f32
    %60 = vector.broadcast %59 : f32 to vector<1x1xf32>
    %61 = arith.addf %57, %60 : vector<1x1xf32>
    %c0_27 = arith.constant 0 : index
    %c0_28 = arith.constant 0 : index
    %62 = vector.load %arg8[%c0_27, %c0_28] : memref<1x1xf32, #tpu.memory_space<vmem>>, vector<1x1xf32>
    tpu.vector_store %arg8[%c0_27, %c0_28], %61 {strides = array<i32>} : memref<1x1xf32, #tpu.memory_space<vmem>>, vector<1x1xf32>,
    %c0_i32_29 = arith.constant 0 : i32
    %63 = arith.cmpi eq, %arg0, %c0_i32_29 : i32
    %64 = arith.extui %63 : i1 to i32
    %c0_i32_30 = arith.constant 0 : i32
    %65 = arith.cmpi ne, %64, %c0_i32_30 : i32
    scf.if %65 {
      %c0_31 = arith.constant 0 : index
      %c0_32 = arith.constant 0 : index
      %66 = vector.load %arg8[%c0_31, %c0_32] : memref<1x1xf32, #tpu.memory_space<vmem>>, vector<1x1xf32>
      %c0_33 = arith.constant 0 : index
      %c0_34 = arith.constant 0 : index
      %67 = vector.load %arg7[%c0_33, %c0_34] : memref<1x1xf32, #tpu.memory_space<vmem>>, vector<1x1xf32>
      tpu.vector_store %arg7[%c0_33, %c0_34], %66 {strides = array<i32>} : memref<1x1xf32, #tpu.memory_space<vmem>>, vector<1x1xf32>,
    } else {
    }
    return
  }
  func.func @transform_0(%arg0: i32) -> (i32, i32) {
    %c0_i32 = arith.constant 0 : i32
    %c0_i32_0 = arith.constant 0 : i32
    %c0_i32_1 = arith.constant 0 : i32
    return %c0_i32, %c0_i32_0 : i32, i32
  }
  func.func @transform_1(%arg0: i32) -> (i32, i32) {
    %c0_i32 = arith.constant 0 : i32
    %c0_i32_0 = arith.constant 0 : i32
    %c0_i32_1 = arith.constant 0 : i32
    return %c0_i32, %c0_i32_0 : i32, i32
  }
  func.func @transform_2(%arg0: i32) -> (i32, i32) {
    %c0_i32 = arith.constant 0 : i32
    %c0_i32_0 = arith.constant 0 : i32
    return %arg0, %c0_i32 : i32, i32
  }
  func.func @transform_3(%arg0: i32) -> (i32, i32, i32) {
    %c0_i32 = arith.constant 0 : i32
    %c0_i32_0 = arith.constant 0 : i32
    %c0_i32_1 = arith.constant 0 : i32
    return %arg0, %c0_i32, %c0_i32_0 : i32, i32, i32
  }
  func.func @transform_4(%arg0: i32) -> (i32, i32, i32) {
    %c0_i32 = arith.constant 0 : i32
    %c0_i32_0 = arith.constant 0 : i32
    %c0_i32_1 = arith.constant 0 : i32
    return %arg0, %c0_i32, %c0_i32_0 : i32, i32, i32
  }
  func.func @transform_5(%arg0: i32) -> i32 {
    %c0_i32 = arith.constant 0 : i32
    %c0_i32_0 = arith.constant 0 : i32
    return %c0_i32 : i32
  }
  func.func @transform_6(%arg0: i32) -> (i32, i32) {
    %c0_i32 = arith.constant 0 : i32
    %c0_i32_0 = arith.constant 0 : i32
    %c0_i32_1 = arith.constant 0 : i32
    return %c0_i32, %c0_i32_0 : i32, i32
  }
}

</mosaic_0001>

<llo_original>
// kernel: tpu_custom_call.1
$region0: #{tpu_custom_call.1}
  #allocation0 [shape = 'u32[]', space=smem, size = 0x4, offset = 0x4, fixed_abs, tag = 'smem constant byte address 0x4 - core index']
  #allocation1 [shape = 'u32[72,128]{1,0:T(1,128)}', space=vmem, size = 0x9000, scoped, tag = 'internal scratch']
  #allocation2 [shape = 'f32[1,1]{1,0:T(1,128)}', space=vmem, size = 0x200, scoped, tag = 'scratch operand']
  #allocation3 [shape = 'f32[1]{0:T(128)S(6)}', space=smem, size = 0x200, scoped, tag = 'scoped memory for tpu_custom_call.1']
  %s0 = inlined_call_operand.vmem [shape: f32[4,6], index: 0, kind: input, shape index: {}]
  %s1 = inlined_call_operand.vmem [shape: s32[4,1], index: 1, kind: input, shape index: {}]
  %s2 = inlined_call_operand.vmem [shape: f32[4,32], index: 2, kind: input, shape index: {}]
  %s3 = inlined_call_operand.vmem [shape: f32[4,25,32], index: 3, kind: input, shape index: {}]
  %s4 = inlined_call_operand.vmem [shape: f32[4,25,32], index: 4, kind: input, shape index: {}]
  %s5 = inlined_call_operand.<no memory space> [shape: f32[1], index: 5, kind: input, shape index: {}]
  %s6 = inlined_call_operand.hbm [shape: f32[1,1], index: 6, kind: output, shape index: {}]
  %s7 = sld [smem:[#allocation0]]
  $region42: #{tpu_custom_call.1} parent=0
    _
  %s9 = ssub.s32 1, %s7
  %s10 = scalar_select 0, %s9, %s7
  %11 = sst [smem:[#allocation3]] %s5
  $region1: #{tpu_custom_call.1} parent=0
    #allocation4 [shape = 'u8[512]{0}', space=vmem, size = 0x400, scoped, tag = 'output window, operand 0, single buffered']
    #allocation5 [shape = 's32[1]{0}', space=sflag, size = 0x4, scoped, tag = 'scoped memory for tpu_custom_call.1']
    %12 = vsyncpa [#allocation5], 0
    // Predicated region
    $region2: #{tpu_custom_call.1} parent=1 // pred_check
      _
    $region3: #{tpu_custom_call.1} parent=1 // pred_check_branch
      %14 = sbr.rel (0) target = $region5
    $region4: #{tpu_custom_call.1} parent=1 // pred_region
      _
    $region5: #{tpu_custom_call.1} parent=1 // pred_fallthru
      _
    // Predicated region
    $region6: #{tpu_custom_call.1} parent=1 // pred_check
      _
    $region7: #{tpu_custom_call.1} parent=1 // pred_check_branch
      %16 = sbr.rel (0) target = $region9
    $region8: #{tpu_custom_call.1} parent=1 // pred_region
      _
    $region9: #{tpu_custom_call.1} parent=1 // pred_fallthru
      _
    // Predicated region
    $region10: #{tpu_custom_call.1} parent=1 // pred_check
      _
    $region11: #{tpu_custom_call.1} parent=1 // pred_check_branch
      %18 = sbr.rel (0) target = $region13
    $region12: #{tpu_custom_call.1} parent=1 // pred_region
      _
    $region13: #{tpu_custom_call.1} parent=1 // pred_fallthru
      _
    // Predicated region
    $region14: #{tpu_custom_call.1} parent=1 // pred_check
      _
    $region15: #{tpu_custom_call.1} parent=1 // pred_check_branch
      %20 = sbr.rel (0) target = $region17
    $region16: #{tpu_custom_call.1} parent=1 // pred_region
      _
    $region17: #{tpu_custom_call.1} parent=1 // pred_fallthru
      _
    // Predicated region
    $region18: #{tpu_custom_call.1} parent=1 // pred_check
      _
    $region19: #{tpu_custom_call.1} parent=1 // pred_check_branch
      %22 = sbr.rel (0) target = $region21
    $region20: #{tpu_custom_call.1} parent=1 // pred_region
      _
    $region21: #{tpu_custom_call.1} parent=1 // pred_fallthru
      _
    // Predicated region
    $region22: #{tpu_custom_call.1} parent=1 // pred_check
      _
    $region23: #{tpu_custom_call.1} parent=1 // pred_check_branch
      %24 = sbr.rel (0) target = $region25
    $region24: #{tpu_custom_call.1} parent=1 // pred_region
      _
    $region25: #{tpu_custom_call.1} parent=1 // pred_fallthru
      _
    %p25 = scmp.eq.s32.totalorder 0, 0
    // Predicated region
    $region26: #{tpu_custom_call.1} parent=1 // pred_check
      %p26 = pneg %p25
    $region27: #{tpu_custom_call.1} parent=1 // pred_check_branch
      %28 = sbr.rel (%p26) target = $region29
    $region28: #{tpu_custom_call.1} parent=1 // pred_region
      %v29 = vld [vmem:[%s0] sm:$0xf]
      %v30 = vld [vmem:[%s1] sm:$0xf]
      %v31 = vlaneseq
      %v32 = vand.u32 %v31, 127
      %33 = vset.pattern.permute.xlu0 0
      %34 = vperm.xlu0 %33, %v30
      %v35 = vpop.permute.xlu0 %34
      %vm36 = vcmp.eq.s32.totalorder %v32, %v35
      %v37 = vsel %vm36, 1, 0
      %v38 = vcvt.s32.f32 %v37
      %vm39 = vcmask 44032
      %v40 = vsel %vm39, %v29, -inf
      %41 = vmax.xlane.f32.xlu0 %v40
      %v42 = vpop.xlane.xlu0 %41
      %v43 = vsub.f32 %v29, %v42
      %v44 = vmul.f32 %v43, 1.442695
      %v45 = vpow.pop %v44
      %v46 = vsel %vm39, %v45, 0.0
      %47 = vadd.xlane.f32.xlu0 %v46
      %v48 = vpop.xlane.xlu0 %47
      %v49 = vlog2.pop %v48
      %v50 = vmul.f32 %v49, 0.6931472
      %v51 = vadd.f32 %v42, %v50
      %v52 = vmul.f32 %v38, %v29
      %v53 = vsel %vm39, %v52, 0.0
      %54 = vadd.xlane.f32.xlu0 %v53
      %v55 = vpop.xlane.xlu0 %54
      %v56 = vsub.f32 %v51, %v55
      %vm57 = vcmask 3072
      %v58 = vsel %vm57, %v56, 0.0
      %59 = vadd.xlane.f32.xlu0 %v58
      %v60 = vpop.xlane.xlu0 %59
      %v61 = vrot.slane %v60, 4
      %v62 = vadd.f32 %v60, %v61
      %v63 = vrot.slane %v62, 2
      %v64 = vadd.f32 %v62, %v63
      %v65 = vrot.slane %v64, 1
      %v66 = vadd.f32 %v64, %v65
      %s67 = vtos %v66
      %v68 = vrcp.pop 4.0
      %v69 = vmul.f32 4.0, %v68
      %v70 = vsub.f32 1.0, %v69
      %v71 = vmul.f32 %v68, %v70
      %v72 = vadd.f32 %v68, %v71
      %vm73 = vweird.f32 %v68
      %v74 = vsel %vm73, %v68, %v72
      %s75 = vtos %v74
      %s76 = smul.f32 %s67, %s75
      %v77 = vstv %s76
      %vm78 = vcmask 0
      %79 = vst.msk [vmem:[#allocation2] sm:$0x1] %vm78, %v77
    $region29: #{tpu_custom_call.1} parent=1 // pred_fallthru
      _
    %v80 = vld [vmem:[%s2] sm:$0xf]
    %v81 = vld [vmem:[%s3] sm:$0xff]
    %v82 = vld [vmem:[%s3 + $0x8] sm:$0xff]
    %v83 = vld [vmem:[%s3 + $0x10] sm:$0xff]
    %v84 = vld [vmem:[%s3 + $0x18] sm:$0x1]
    %v85 = vld [vmem:[%s3 + $0x20] sm:$0xff]
    %v86 = vld [vmem:[%s3 + $0x28] sm:$0xff]
    %v87 = vld [vmem:[%s3 + $0x30] sm:$0xff]
    %v88 = vld [vmem:[%s3 + $0x38] sm:$0x1]
    %v89 = vld [vmem:[%s3 + $0x40] sm:$0xff]
    %v90 = vld [vmem:[%s3 + $0x48] sm:$0xff]
    %v91 = vld [vmem:[%s3 + $0x50] sm:$0xff]
    %v92 = vld [vmem:[%s3 + $0x58] sm:$0x1]
    %v93 = vld [vmem:[%s3 + $0x60] sm:$0xff]
    %v94 = vld [vmem:[%s3 + $0x68] sm:$0xff]
    %v95 = vld [vmem:[%s3 + $0x70] sm:$0xff]
    %v96 = vld [vmem:[%s3 + $0x78] sm:$0x1]
    %v97 = vld [vmem:[%s4] sm:$0xff]
    %v98 = vld [vmem:[%s4 + $0x8] sm:$0xff]
    %v99 = vld [vmem:[%s4 + $0x10] sm:$0xff]
    %v100 = vld [vmem:[%s4 + $0x18] sm:$0x1]
    %v101 = vld [vmem:[%s4 + $0x20] sm:$0xff]
    %v102 = vld [vmem:[%s4 + $0x28] sm:$0xff]
    %v103 = vld [vmem:[%s4 + $0x30] sm:$0xff]
    %v104 = vld [vmem:[%s4 + $0x38] sm:$0x1]
    %v105 = vld [vmem:[%s4 + $0x40] sm:$0xff]
    %v106 = vld [vmem:[%s4 + $0x48] sm:$0xff]
    %v107 = vld [vmem:[%s4 + $0x50] sm:$0xff]
    %v108 = vld [vmem:[%s4 + $0x58] sm:$0x1]
    %v109 = vld [vmem:[%s4 + $0x60] sm:$0xff]
    %v110 = vld [vmem:[%s4 + $0x68] sm:$0xff]
    %v111 = vld [vmem:[%s4 + $0x70] sm:$0xff]
    %v112 = vld [vmem:[%s4 + $0x78] sm:$0x1]
    %v114 = vrot.slane %v80, 1
    %v115 = vrot.slane %v80, 2
    %v116 = vrot.slane %v80, 3
    %v117 = vperm.slane %v80, 0
    %v118 = vperm.slane %v114, 0
    %v119 = vperm.slane %v115, 0
    %v120 = vperm.slane %v116, 0
    %v125 = vmul.f32 %v81, %v117
    %v126 = vmul.f32 %v82, %v117
    %v127 = vmul.f32 %v83, %v117
    %v128 = vmul.f32 %v84, %v117
    %v129 = vmul.f32 %v85, %v118
    %v130 = vmul.f32 %v86, %v118
    %v131 = vmul.f32 %v87, %v118
    %v132 = vmul.f32 %v88, %v118
    %v133 = vmul.f32 %v89, %v119
    %v134 = vmul.f32 %v90, %v119
    %v135 = vmul.f32 %v91, %v119
    %v136 = vmul.f32 %v92, %v119
    %v137 = vmul.f32 %v93, %v120
    %v138 = vmul.f32 %v94, %v120
    %v139 = vmul.f32 %v95, %v120
    %v140 = vmul.f32 %v96, %v120
    %vm141 = vcmask 261120
    %v142 = vsel %vm141, %v125, 0.0
    %143 = vadd.xlane.f32.xlu0 %v142
    %v144 = vpop.xlane.xlu0 %143
    %v145 = vsel %vm141, %v126, 0.0
    %146 = vadd.xlane.f32.xlu0 %v145
    %v147 = vpop.xlane.xlu0 %146
    %v148 = vsel %vm141, %v127, 0.0
    %149 = vadd.xlane.f32.xlu0 %v148
    %v150 = vpop.xlane.xlu0 %149
    %vm151 = vcmask 253952
    %v152 = vsel %vm151, %v128, 0.0
    %153 = vadd.xlane.f32.xlu0 %v152
    %v154 = vpop.xlane.xlu0 %153
    %v155 = vsel %vm141, %v129, 0.0
    %156 = vadd.xlane.f32.xlu0 %v155
    %v157 = vpop.xlane.xlu0 %156
    %v158 = vsel %vm141, %v130, 0.0
    %159 = vadd.xlane.f32.xlu0 %v158
    %v160 = vpop.xlane.xlu0 %159
    %v161 = vsel %vm141, %v131, 0.0
    %162 = vadd.xlane.f32.xlu0 %v161
    %v163 = vpop.xlane.xlu0 %162
    %v164 = vsel %vm151, %v132, 0.0
    %165 = vadd.xlane.f32.xlu0 %v164
    %v166 = vpop.xlane.xlu0 %165
    %v167 = vsel %vm141, %v133, 0.0
    %168 = vadd.xlane.f32.xlu0 %v167
    %v169 = vpop.xlane.xlu0 %168
    %v170 = vsel %vm141, %v134, 0.0
    %171 = vadd.xlane.f32.xlu0 %v170
    %v172 = vpop.xlane.xlu0 %171
    %v173 = vsel %vm141, %v135, 0.0
    %174 = vadd.xlane.f32.xlu0 %v173
    %v175 = vpop.xlane.xlu0 %174
    %v176 = vsel %vm151, %v136, 0.0
    %177 = vadd.xlane.f32.xlu0 %v176
    %v178 = vpop.xlane.xlu0 %177
    %v179 = vsel %vm141, %v137, 0.0
    %180 = vadd.xlane.f32.xlu0 %v179
    %v181 = vpop.xlane.xlu0 %180
    %v182 = vsel %vm141, %v138, 0.0
    %183 = vadd.xlane.f32.xlu0 %v182
    %v184 = vpop.xlane.xlu0 %183
    %v185 = vsel %vm141, %v139, 0.0
    %186 = vadd.xlane.f32.xlu0 %v185
    %v187 = vpop.xlane.xlu0 %186
    %v188 = vsel %vm151, %v140, 0.0
    %189 = vadd.xlane.f32.xlu0 %v188
    %v190 = vpop.xlane.xlu0 %189
    %v191 = vmul.f32 %v97, %v117
    %v192 = vmul.f32 %v98, %v117
    %v193 = vmul.f32 %v99, %v117
    %v194 = vmul.f32 %v100, %v117
    %v195 = vmul.f32 %v101, %v118
    %v196 = vmul.f32 %v102, %v118
    %v197 = vmul.f32 %v103, %v118
    %v198 = vmul.f32 %v104, %v118
    %v199 = vmul.f32 %v105, %v119
    %v200 = vmul.f32 %v106, %v119
    %v201 = vmul.f32 %v107, %v119
    %v202 = vmul.f32 %v108, %v119
    %v203 = vmul.f32 %v109, %v120
    %v204 = vmul.f32 %v110, %v120
    %v205 = vmul.f32 %v111, %v120
    %v206 = vmul.f32 %v112, %v120
    %v207 = vsel %vm141, %v191, 0.0
    %208 = vadd.xlane.f32.xlu0 %v207
    %v209 = vpop.xlane.xlu0 %208
    %v210 = vsel %vm141, %v192, 0.0
    %211 = vadd.xlane.f32.xlu0 %v210
    %v212 = vpop.xlane.xlu0 %211
    %v213 = vsel %vm141, %v193, 0.0
    %214 = vadd.xlane.f32.xlu0 %v213
    %v215 = vpop.xlane.xlu0 %214
    %v216 = vsel %vm151, %v194, 0.0
    %217 = vadd.xlane.f32.xlu0 %v216
    %v218 = vpop.xlane.xlu0 %217
    %v219 = vsel %vm141, %v195, 0.0
    %220 = vadd.xlane.f32.xlu0 %v219
    %v221 = vpop.xlane.xlu0 %220
    %v222 = vsel %vm141, %v196, 0.0
    %223 = vadd.xlane.f32.xlu0 %v222
    %v224 = vpop.xlane.xlu0 %223
    %v225 = vsel %vm141, %v197, 0.0
    %226 = vadd.xlane.f32.xlu0 %v225
    %v227 = vpop.xlane.xlu0 %226
    %v228 = vsel %vm151, %v198, 0.0
    %229 = vadd.xlane.f32.xlu0 %v228
    %v230 = vpop.xlane.xlu0 %229
    %v231 = vsel %vm141, %v199, 0.0
    %232 = vadd.xlane.f32.xlu0 %v231
    %v233 = vpop.xlane.xlu0 %232
    %v234 = vsel %vm141, %v200, 0.0
    %235 = vadd.xlane.f32.xlu0 %v234
    %v236 = vpop.xlane.xlu0 %235
    %v237 = vsel %vm141, %v201, 0.0
    %238 = vadd.xlane.f32.xlu0 %v237
    %v239 = vpop.xlane.xlu0 %238
    %v240 = vsel %vm151, %v202, 0.0
    %241 = vadd.xlane.f32.xlu0 %v240
    %v242 = vpop.xlane.xlu0 %241
    %v243 = vsel %vm141, %v203, 0.0
    %244 = vadd.xlane.f32.xlu0 %v243
    %v245 = vpop.xlane.xlu0 %244
    %v246 = vsel %vm141, %v204, 0.0
    %247 = vadd.xlane.f32.xlu0 %v246
    %v248 = vpop.xlane.xlu0 %247
    %v249 = vsel %vm141, %v205, 0.0
    %250 = vadd.xlane.f32.xlu0 %v249
    %v251 = vpop.xlane.xlu0 %250
    %v252 = vsel %vm151, %v206, 0.0
    %253 = vadd.xlane.f32.xlu0 %v252
    %v254 = vpop.xlane.xlu0 %253
    %v255 = vsub.f32 0.0, %v144
    %v256 = vsub.f32 0.0, %v147
    %v257 = vsub.f32 0.0, %v150
    %v258 = vsub.f32 0.0, %v154
    %v259 = vsub.f32 0.0, %v157
    %v260 = vsub.f32 0.0, %v160
    %v261 = vsub.f32 0.0, %v163
    %v262 = vsub.f32 0.0, %v166
    %v263 = vsub.f32 0.0, %v169
    %v264 = vsub.f32 0.0, %v172
    %v265 = vsub.f32 0.0, %v175
    %v266 = vsub.f32 0.0, %v178
    %v267 = vsub.f32 0.0, %v181
    %v268 = vsub.f32 0.0, %v184
    %v269 = vsub.f32 0.0, %v187
    %v270 = vsub.f32 0.0, %v190
    %v271 = vmax.f32 %v255, 0.0
    %v272 = vmax.f32 %v256, 0.0
    %v273 = vmax.f32 %v257, 0.0
    %v274 = vmax.f32 %v258, 0.0
    %v275 = vmax.f32 %v259, 0.0
    %v276 = vmax.f32 %v260, 0.0
    %v277 = vmax.f32 %v261, 0.0
    %v278 = vmax.f32 %v262, 0.0
    %v279 = vmax.f32 %v263, 0.0
    %v280 = vmax.f32 %v264, 0.0
    %v281 = vmax.f32 %v265, 0.0
    %v282 = vmax.f32 %v266, 0.0
    %v283 = vmax.f32 %v267, 0.0
    %v284 = vmax.f32 %v268, 0.0
    %v285 = vmax.f32 %v269, 0.0
    %v286 = vmax.f32 %v270, 0.0
    %v287 = vand.u32 2147483647, %v255
    %v288 = vand.u32 2147483647, %v256
    %v289 = vand.u32 2147483647, %v257
    %v290 = vand.u32 2147483647, %v258
    %v291 = vand.u32 2147483647, %v259
    %v292 = vand.u32 2147483647, %v260
    %v293 = vand.u32 2147483647, %v261
    %v294 = vand.u32 2147483647, %v262
    %v295 = vand.u32 2147483647, %v263
    %v296 = vand.u32 2147483647, %v264
    %v297 = vand.u32 2147483647, %v265
    %v298 = vand.u32 2147483647, %v266
    %v299 = vand.u32 2147483647, %v267
    %v300 = vand.u32 2147483647, %v268
    %v301 = vand.u32 2147483647, %v269
    %v302 = vand.u32 2147483647, %v270
    %v303 = vsub.f32 0.0, %v287
    %v304 = vsub.f32 0.0, %v288
    %v305 = vsub.f32 0.0, %v289
    %v306 = vsub.f32 0.0, %v290
    %v307 = vsub.f32 0.0, %v291
    %v308 = vsub.f32 0.0, %v292
    %v309 = vsub.f32 0.0, %v293
    %v310 = vsub.f32 0.0, %v294
    %v311 = vsub.f32 0.0, %v295
    %v312 = vsub.f32 0.0, %v296
    %v313 = vsub.f32 0.0, %v297
    %v314 = vsub.f32 0.0, %v298
    %v315 = vsub.f32 0.0, %v299
    %v316 = vsub.f32 0.0, %v300
    %v317 = vsub.f32 0.0, %v301
    %v318 = vsub.f32 0.0, %v302
    %v319 = vmul.f32 %v303, 1.442695
    %v320 = vpow.pop %v319
    %v321 = vmul.f32 %v304, 1.442695
    %v322 = vpow.pop %v321
    %v323 = vmul.f32 %v305, 1.442695
    %v324 = vpow.pop %v323
    %v325 = vmul.f32 %v306, 1.442695
    %v326 = vpow.pop %v325
    %v327 = vmul.f32 %v307, 1.442695
    %v328 = vpow.pop %v327
    %v329 = vmul.f32 %v308, 1.442695
    %v330 = vpow.pop %v329
    %v331 = vmul.f32 %v309, 1.442695
    %v332 = vpow.pop %v331
    %v333 = vmul.f32 %v310, 1.442695
    %v334 = vpow.pop %v333
    %v335 = vmul.f32 %v311, 1.442695
    %v336 = vpow.pop %v335
    %v337 = vmul.f32 %v312, 1.442695
    %v338 = vpow.pop %v337
    %v339 = vmul.f32 %v313, 1.442695
    %v340 = vpow.pop %v339
    %v341 = vmul.f32 %v314, 1.442695
    %v342 = vpow.pop %v341
    %v343 = vmul.f32 %v315, 1.442695
    %v344 = vpow.pop %v343
    %v345 = vmul.f32 %v316, 1.442695
    %v346 = vpow.pop %v345
    %v347 = vmul.f32 %v317, 1.442695
    %v348 = vpow.pop %v347
    %v349 = vmul.f32 %v318, 1.442695
    %v350 = vpow.pop %v349
    %v351 = vadd.f32 %v320, 1.0
    %v352 = vadd.f32 %v322, 1.0
    %v353 = vadd.f32 %v324, 1.0
    %v354 = vadd.f32 %v326, 1.0
    %v355 = vadd.f32 %v328, 1.0
    %v356 = vadd.f32 %v330, 1.0
    %v357 = vadd.f32 %v332, 1.0
    %v358 = vadd.f32 %v334, 1.0
    %v359 = vadd.f32 %v336, 1.0
    %v360 = vadd.f32 %v338, 1.0
    %v361 = vadd.f32 %v340, 1.0
    %v362 = vadd.f32 %v342, 1.0
    %v363 = vadd.f32 %v344, 1.0
    %v364 = vadd.f32 %v346, 1.0
    %v365 = vadd.f32 %v348, 1.0
    %v366 = vadd.f32 %v350, 1.0
    %v367 = vlog2.pop %v351
    %v368 = vmul.f32 %v367, 0.6931472
    %v369 = vlog2.pop %v352
    %v370 = vmul.f32 %v369, 0.6931472
    %v371 = vlog2.pop %v353
    %v372 = vmul.f32 %v371, 0.6931472
    %v373 = vlog2.pop %v354
    %v374 = vmul.f32 %v373, 0.6931472
    %v375 = vlog2.pop %v355
    %v376 = vmul.f32 %v375, 0.6931472
    %v377 = vlog2.pop %v356
    %v378 = vmul.f32 %v377, 0.6931472
    %v379 = vlog2.pop %v357
    %v380 = vmul.f32 %v379, 0.6931472
    %v381 = vlog2.pop %v358
    %v382 = vmul.f32 %v381, 0.6931472
    %v383 = vlog2.pop %v359
    %v384 = vmul.f32 %v383, 0.6931472
    %v385 = vlog2.pop %v360
    %v386 = vmul.f32 %v385, 0.6931472
    %v387 = vlog2.pop %v361
    %v388 = vmul.f32 %v387, 0.6931472
    %v389 = vlog2.pop %v362
    %v390 = vmul.f32 %v389, 0.6931472
    %v391 = vlog2.pop %v363
    %v392 = vmul.f32 %v391, 0.6931472
    %v393 = vlog2.pop %v364
    %v394 = vmul.f32 %v393, 0.6931472
    %v395 = vlog2.pop %v365
    %v396 = vmul.f32 %v395, 0.6931472
    %v397 = vlog2.pop %v366
    %v398 = vmul.f32 %v397, 0.6931472
    %v399 = vadd.f32 %v271, %v368
    %v400 = vadd.f32 %v272, %v370
    %v401 = vadd.f32 %v273, %v372
    %v402 = vadd.f32 %v274, %v374
    %v403 = vadd.f32 %v275, %v376
    %v404 = vadd.f32 %v276, %v378
    %v405 = vadd.f32 %v277, %v380
    %v406 = vadd.f32 %v278, %v382
    %v407 = vadd.f32 %v279, %v384
    %v408 = vadd.f32 %v280, %v386
    %v409 = vadd.f32 %v281, %v388
    %v410 = vadd.f32 %v282, %v390
    %v411 = vadd.f32 %v283, %v392
    %v412 = vadd.f32 %v284, %v394
    %v413 = vadd.f32 %v285, %v396
    %v414 = vadd.f32 %v286, %v398
    %v431 = vlaneseq
    %v432 = vand.u32 %v431, 127
    %v433 = vperm.slane %v399, %v432
    %v434 = vadd.s32 %v432, 4294967288
    %v435 = vperm.slane %v400, %v434
    %vm436 = vcmask 130112
    %v437 = vsel %vm436, %v435, %v433
    %v438 = vadd.s32 %v432, 4294967280
    %v439 = vperm.slane %v401, %v438
    %vm440 = vcmask 195712
    %v441 = vsel %vm440, %v439, %v437
    %v442 = vadd.s32 %v432, 4294967272
    %v443 = vperm.slane %v402, %v442
    %vm444 = vcmask 261312
    %v445 = vsel %vm444, %v443, %v441
    %v446 = vperm.slane %v403, %v432
    %v447 = vperm.slane %v404, %v434
    %v448 = vsel %vm436, %v447, %v446
    %v449 = vperm.slane %v405, %v438
    %v450 = vsel %vm440, %v449, %v448
    %v451 = vperm.slane %v406, %v442
    %v452 = vsel %vm444, %v451, %v450
    %v453 = vperm.slane %v407, %v432
    %v454 = vperm.slane %v408, %v434
    %v455 = vsel %vm436, %v454, %v453
    %v456 = vperm.slane %v409, %v438
    %v457 = vsel %vm440, %v456, %v455
    %v458 = vperm.slane %v410, %v442
    %v459 = vsel %vm444, %v458, %v457
    %v460 = vperm.slane %v411, %v432
    %v461 = vperm.slane %v412, %v434
    %v462 = vsel %vm436, %v461, %v460
    %v463 = vperm.slane %v413, %v438
    %v464 = vsel %vm440, %v463, %v462
    %v465 = vperm.slane %v414, %v442
    %v466 = vsel %vm444, %v465, %v464
    %vm467 = vcmask 1041409
    %v468 = vsel %vm467, %v452, %v445
    %vm469 = vcmask 1042434
    %v470 = vsel %vm469, %v459, %v468
    %vm471 = vcmask 1043459
    %v472 = vsel %vm471, %v466, %v470
    %vm474 = vcmask 199680
    %v475 = vsel %vm474, %v472, 0.0
    %476 = vadd.xlane.f32.xlu0 %v475
    %v477 = vpop.xlane.xlu0 %476
    %v478 = vrcp.pop 25.0
    %v479 = vmul.f32 25.0, %v478
    %v480 = vsub.f32 1.0, %v479
    %v481 = vmul.f32 %v478, %v480
    %v482 = vadd.f32 %v478, %v481
    %vm483 = vweird.f32 %v478
    %v484 = vsel %vm483, %v478, %v482
    %v485 = vmul.f32 %v477, %v484
    %v486 = vmax.f32 %v209, 0.0
    %v487 = vmax.f32 %v212, 0.0
    %v488 = vmax.f32 %v215, 0.0
    %v489 = vmax.f32 %v218, 0.0
    %v490 = vmax.f32 %v221, 0.0
    %v491 = vmax.f32 %v224, 0.0
    %v492 = vmax.f32 %v227, 0.0
    %v493 = vmax.f32 %v230, 0.0
    %v494 = vmax.f32 %v233, 0.0
    %v495 = vmax.f32 %v236, 0.0
    %v496 = vmax.f32 %v239, 0.0
    %v497 = vmax.f32 %v242, 0.0
    %v498 = vmax.f32 %v245, 0.0
    %v499 = vmax.f32 %v248, 0.0
    %v500 = vmax.f32 %v251, 0.0
    %v501 = vmax.f32 %v254, 0.0
    %v502 = vand.u32 2147483647, %v209
    %v503 = vand.u32 2147483647, %v212
    %v504 = vand.u32 2147483647, %v215
    %v505 = vand.u32 2147483647, %v218
    %v506 = vand.u32 2147483647, %v221
    %v507 = vand.u32 2147483647, %v224
    %v508 = vand.u32 2147483647, %v227
    %v509 = vand.u32 2147483647, %v230
    %v510 = vand.u32 2147483647, %v233
    %v511 = vand.u32 2147483647, %v236
    %v512 = vand.u32 2147483647, %v239
    %v513 = vand.u32 2147483647, %v242
    %v514 = vand.u32 2147483647, %v245
    %v515 = vand.u32 2147483647, %v248
    %v516 = vand.u32 2147483647, %v251
    %v517 = vand.u32 2147483647, %v254
    %v518 = vsub.f32 0.0, %v502
    %v519 = vsub.f32 0.0, %v503
    %v520 = vsub.f32 0.0, %v504
    %v521 = vsub.f32 0.0, %v505
    %v522 = vsub.f32 0.0, %v506
    %v523 = vsub.f32 0.0, %v507
    %v524 = vsub.f32 0.0, %v508
    %v525 = vsub.f32 0.0, %v509
    %v526 = vsub.f32 0.0, %v510
    %v527 = vsub.f32 0.0, %v511
    %v528 = vsub.f32 0.0, %v512
    %v529 = vsub.f32 0.0, %v513
    %v530 = vsub.f32 0.0, %v514
    %v531 = vsub.f32 0.0, %v515
    %v532 = vsub.f32 0.0, %v516
    %v533 = vsub.f32 0.0, %v517
    %v534 = vmul.f32 %v518, 1.442695
    %v535 = vpow.pop %v534
    %v536 = vmul.f32 %v519, 1.442695
    %v537 = vpow.pop %v536
    %v538 = vmul.f32 %v520, 1.442695
    %v539 = vpow.pop %v538
    %v540 = vmul.f32 %v521, 1.442695
    %v541 = vpow.pop %v540
    %v542 = vmul.f32 %v522, 1.442695
    %v543 = vpow.pop %v542
    %v544 = vmul.f32 %v523, 1.442695
    %v545 = vpow.pop %v544
    %v546 = vmul.f32 %v524, 1.442695
    %v547 = vpow.pop %v546
    %v548 = vmul.f32 %v525, 1.442695
    %v549 = vpow.pop %v548
    %v550 = vmul.f32 %v526, 1.442695
    %v551 = vpow.pop %v550
    %v552 = vmul.f32 %v527, 1.442695
    %v553 = vpow.pop %v552
    %v554 = vmul.f32 %v528, 1.442695
    %v555 = vpow.pop %v554
    %v556 = vmul.f32 %v529, 1.442695
    %v557 = vpow.pop %v556
    %v558 = vmul.f32 %v530, 1.442695
    %v559 = vpow.pop %v558
    %v560 = vmul.f32 %v531, 1.442695
    %v561 = vpow.pop %v560
    %v562 = vmul.f32 %v532, 1.442695
    %v563 = vpow.pop %v562
    %v564 = vmul.f32 %v533, 1.442695
    %v565 = vpow.pop %v564
    %v566 = vadd.f32 %v535, 1.0
    %v567 = vadd.f32 %v537, 1.0
    %v568 = vadd.f32 %v539, 1.0
    %v569 = vadd.f32 %v541, 1.0
    %v570 = vadd.f32 %v543, 1.0
    %v571 = vadd.f32 %v545, 1.0
    %v572 = vadd.f32 %v547, 1.0
    %v573 = vadd.f32 %v549, 1.0
    %v574 = vadd.f32 %v551, 1.0
    %v575 = vadd.f32 %v553, 1.0
    %v576 = vadd.f32 %v555, 1.0
    %v577 = vadd.f32 %v557, 1.0
    %v578 = vadd.f32 %v559, 1.0
    %v579 = vadd.f32 %v561, 1.0
    %v580 = vadd.f32 %v563, 1.0
    %v581 = vadd.f32 %v565, 1.0
    %v582 = vlog2.pop %v566
    %v583 = vmul.f32 %v582, 0.6931472
    %v584 = vlog2.pop %v567
    %v585 = vmul.f32 %v584, 0.6931472
    %v586 = vlog2.pop %v568
    %v587 = vmul.f32 %v586, 0.6931472
    %v588 = vlog2.pop %v569
    %v589 = vmul.f32 %v588, 0.6931472
    %v590 = vlog2.pop %v570
    %v591 = vmul.f32 %v590, 0.6931472
    %v592 = vlog2.pop %v571
    %v593 = vmul.f32 %v592, 0.6931472
    %v594 = vlog2.pop %v572
    %v595 = vmul.f32 %v594, 0.6931472
    %v596 = vlog2.pop %v573
    %v597 = vmul.f32 %v596, 0.6931472
    %v598 = vlog2.pop %v574
    %v599 = vmul.f32 %v598, 0.6931472
    %v600 = vlog2.pop %v575
    %v601 = vmul.f32 %v600, 0.6931472
    %v602 = vlog2.pop %v576
    %v603 = vmul.f32 %v602, 0.6931472
    %v604 = vlog2.pop %v577
    %v605 = vmul.f32 %v604, 0.6931472
    %v606 = vlog2.pop %v578
    %v607 = vmul.f32 %v606, 0.6931472
    %v608 = vlog2.pop %v579
    %v609 = vmul.f32 %v608, 0.6931472
    %v610 = vlog2.pop %v580
    %v611 = vmul.f32 %v610, 0.6931472
    %v612 = vlog2.pop %v581
    %v613 = vmul.f32 %v612, 0.6931472
    %v614 = vadd.f32 %v486, %v583
    %v615 = vadd.f32 %v487, %v585
    %v616 = vadd.f32 %v488, %v587
    %v617 = vadd.f32 %v489, %v589
    %v618 = vadd.f32 %v490, %v591
    %v619 = vadd.f32 %v491, %v593
    %v620 = vadd.f32 %v492, %v595
    %v621 = vadd.f32 %v493, %v597
    %v622 = vadd.f32 %v494, %v599
    %v623 = vadd.f32 %v495, %v601
    %v624 = vadd.f32 %v496, %v603
    %v625 = vadd.f32 %v497, %v605
    %v626 = vadd.f32 %v498, %v607
    %v627 = vadd.f32 %v499, %v609
    %v628 = vadd.f32 %v500, %v611
    %v629 = vadd.f32 %v501, %v613
    %v646 = vperm.slane %v614, %v432
    %v647 = vperm.slane %v615, %v434
    %v648 = vsel %vm436, %v647, %v646
    %v649 = vperm.slane %v616, %v438
    %v650 = vsel %vm440, %v649, %v648
    %v651 = vperm.slane %v617, %v442
    %v652 = vsel %vm444, %v651, %v650
    %v653 = vperm.slane %v618, %v432
    %v654 = vperm.slane %v619, %v434
    %v655 = vsel %vm436, %v654, %v653
    %v656 = vperm.slane %v620, %v438
    %v657 = vsel %vm440, %v656, %v655
    %v658 = vperm.slane %v621, %v442
    %v659 = vsel %vm444, %v658, %v657
    %v660 = vperm.slane %v622, %v432
    %v661 = vperm.slane %v623, %v434
    %v662 = vsel %vm436, %v661, %v660
    %v663 = vperm.slane %v624, %v438
    %v664 = vsel %vm440, %v663, %v662
    %v665 = vperm.slane %v625, %v442
    %v666 = vsel %vm444, %v665, %v664
    %v667 = vperm.slane %v626, %v432
    %v668 = vperm.slane %v627, %v434
    %v669 = vsel %vm436, %v668, %v667
    %v670 = vperm.slane %v628, %v438
    %v671 = vsel %vm440, %v670, %v669
    %v672 = vperm.slane %v629, %v442
    %v673 = vsel %vm444, %v672, %v671
    %v674 = vsel %vm467, %v659, %v652
    %v675 = vsel %vm469, %v666, %v674
    %v676 = vsel %vm471, %v673, %v675
    %v678 = vsel %vm474, %v676, 0.0
    %679 = vadd.xlane.f32.xlu0 %v678
    %v680 = vpop.xlane.xlu0 %679
    %v681 = vmul.f32 %v680, %v484
    %s682 = smul.u32 0, 4
    %v683 = vlaneseq
    %v684 = vshrl.u32 %v683, 7
    %v685 = vstv %s682
    %v686 = vadd.s32 %v685, %v684
    %vm687 = vcmp.lt.s32.totalorder %v686, 4
    %v688 = vadd.f32 %v485, %v681
    %v689 = vsel %vm687, %v688, 0.0
    %vm690 = vcmask 3072
    %v691 = vsel %vm690, %v689, 0.0
    %692 = vadd.xlane.f32.xlu0 %v691
    %v693 = vpop.xlane.xlu0 %692
    %v694 = vrot.slane %v693, 4
    %v695 = vadd.f32 %v693, %v694
    %v696 = vrot.slane %v695, 2
    %v697 = vadd.f32 %v695, %v696
    %v698 = vrot.slane %v697, 1
    %v699 = vadd.f32 %v697, %v698
    %s700 = vtos %v699
    %s701 = ssub.f32 0.0, %s700
    %v702 = vld [vmem:[#allocation2] sm:$0x1]
    %s703 = sld [smem:[#allocation3]]
    %s704 = smul.f32 %s703, %s701
    %v705 = vstv %s704
    %v706 = vadd.f32 %v702, %v705
    %vm707 = vcmask 0
    %708 = vst.msk [vmem:[#allocation2] sm:$0x1] %vm707, %v706
    // Predicated region
    $region30: #{tpu_custom_call.1} parent=1 // pred_check
      %p709 = pneg %p25
    $region31: #{tpu_custom_call.1} parent=1 // pred_check_branch
      %711 = sbr.rel (%p709) target = $region33
    $region32: #{tpu_custom_call.1} parent=1 // pred_region
      %v712 = vld [vmem:[#allocation2] sm:$0x1]
      %713 = vst.msk [vmem:[#allocation4] sm:$0x1] %vm707, %v712
    $region33: #{tpu_custom_call.1} parent=1 // pred_fallthru
      _
    // Predicated region
    $region34: #{tpu_custom_call.1} parent=1 // pred_check
      _
    $region35: #{tpu_custom_call.1} parent=1 // pred_check_branch
      %715 = sbr.rel (0) target = $region37
    $region36: #{tpu_custom_call.1} parent=1 // pred_region
      %717 = vsyncadd [#allocation5], 0
      %s719 = sshll.u32 [#allocation4], 4
      %s720 = int_to_ptr.vmem [resolvable:$true] %s719
      %s721 = sshll.u32 %s6, 4
      %s722 = int_to_ptr.hbm [resolvable:$true] %s721
      %724 = dma.vmem_to_hbm [thread:$0]  %s720, 16, %s722, [#allocation5]
    $region37: #{tpu_custom_call.1} parent=1 // pred_fallthru
      _
    // Predicated region
    $region38: #{tpu_custom_call.1} parent=1 // pred_check
      _
    $region39: #{tpu_custom_call.1} parent=1 // pred_check_branch
      %726 = sbr.rel (0) target = $region41
    $region40: #{tpu_custom_call.1} parent=1 // pred_region
      %728 = dma.done [#allocation5], 16
    $region41: #{tpu_custom_call.1} parent=1 // pred_fallthru
      _
    %729 = vsyncpa [#allocation5], 1

</llo_original>
